<compile_context>
chip_gen: v7x
topology: tpu7x:2x2x1
jax: 0.10.0
libtpu: 0.0.40
codegen_flags: <defaults>
</compile_context>

<pallas_src>
import numpy as np
import jax
import jax.numpy as jnp
from jax import lax
from jax.experimental import pallas as pl
from jax.experimental.pallas import tpu as pltpu


RADIUS = 4
SIGMA_1 = 5.0
SIGMA_2 = 1.0


def _gaussian_1d(radius: int, sigma: float) -> np.ndarray:
    # 1-D factor of Filter.gaussian_kernel: g[m] = exp(-(m-radius)^2 / (2 sigma^2));
    # outer(g, g) reproduces the W-Net 2-D filter (center weight == 1, unnormalized).
    coords = np.arange(-radius, radius + 1, dtype=np.float64)
    return np.exp(-(coords ** 2) / (2.0 * sigma ** 2))


def _band_matrix(size: int, g1d: np.ndarray, radius: int) -> np.ndarray:
    # A[i, j] = g(j - i) for |j - i| <= radius, else 0 (symmetric banded Toeplitz).
    # Zero-padded 1-D correlation along an axis is then a matmul with A.
    A = np.zeros((size, size), dtype=np.float64)
    for i in range(size):
        for j in range(size):
            d = j - i
            if abs(d) <= radius:
                A[i, j] = g1d[d + radius]
    return A.astype(np.float32)


def _make_ncut_kernel(N: int, K: int, C: int, HW: int, sigma_2: float):
    inv_s2_sq = float(-1.0 / (sigma_2 ** 2))

    def kernel(p_ref, x_ref, g_ref, out_ref):
        p2 = p_ref[...]          # (N*K, HW) lane-dense class probabilities
        x2 = x_ref[...]          # (N*C, HW) lane-dense raw images

        # ---- conv(p) = p_flat @ kron(A_H, A_W): one well-shaped MXU matmul.
        # (Only conv(p) is needed thanks to the adjoint identity for a symmetric
        #  zero-padded filter; the chain depends only on labels.)
        conv_p = jnp.dot(p2, g_ref[...],
                         preferred_element_type=jnp.float32)        # (N*K, HW)

        # ---- class-mean denominators (shared across channels).
        p_mean = jnp.mean(p2, axis=-1, keepdims=True)                # (N*K, 1)
        cm_den = p_mean + 1e-5

        # ---- per-batch weights + fused epilogue, accumulated per class.
        num_k = jnp.zeros((K, 1), jnp.float32)
        den_k = jnp.zeros((K, 1), jnp.float32)
        for n in range(N):                                           # static, N small
            p_n = p2[n * K:(n + 1) * K, :]                           # (K, HW)
            cmd_n = cm_den[n * K:(n + 1) * K, :]                     # (K, 1)
            d_n = jnp.zeros((K, HW), jnp.float32)
            for c in range(C):                                       # static, C small
                xc = x2[n * C + c:n * C + c + 1, :]                  # (1, HW)
                cm = jnp.mean(xc * p_n, axis=-1, keepdims=True) / cmd_n  # (K, 1)
                d = xc - cm                                          # (K, HW)
                d_n = d_n + d * d
            wts_n = jnp.exp((d_n * d_n) * inv_s2_sq)                 # (K, HW), EUP
            cw_n = conv_p[n * K:(n + 1) * K, :] * wts_n              # conv(p)*w once
            num_k = num_k + jnp.sum(cw_n * p_n, axis=-1, keepdims=True)
            den_k = den_k + jnp.sum(cw_n, axis=-1, keepdims=True)

        ratios = jnp.abs(num_k / (den_k + 1e-6))                     # L1 vs zeros
        out_ref[0] = jnp.float32(K) - jnp.sum(ratios)                # num_classes - loss

    return kernel


def ncut_loss_2d(labels: jax.Array, inputs: jax.Array,
                 radius: int = RADIUS, sigma_1: float = SIGMA_1,
                 sigma_2: float = SIGMA_2) -> jax.Array:
    """Continuous N-Cut loss.  labels: (N, K, H, W) probs, inputs: (N, C, H, W)."""
    labels = labels.astype(jnp.float32)
    inputs = inputs.astype(jnp.float32)
    N, K, H, W = labels.shape
    _, C, _, _ = inputs.shape
    HW = H * W

    g = _gaussian_1d(radius, sigma_1)
    # The adjoint identity used in the kernel (sum(p*conv(q)) == sum(conv(p)*q))
    # is exact only for a SYMMETRIC filter with zero padding — guard it.
    assert np.allclose(g, g[::-1]), "Gaussian filter must be symmetric"
    a_h = _band_matrix(H, g, radius)
    a_w = _band_matrix(W, g, radius)
    # conv(p) = A_H @ p @ A_W; with a row-major (H, W) flatten and symmetric band
    # matrices this is p_flat @ kron(A_H, A_W).
    g_op = jnp.asarray(np.kron(a_h, a_w).astype(np.float32))         # (HW, HW)

    # Free row-major views -> the DMA lands lane-dense (no in-kernel relayout).
    labels2 = labels.reshape(N * K, HW)
    inputs2 = inputs.reshape(N * C, HW)

    kernel = _make_ncut_kernel(N, K, C, HW, sigma_2)

    cost = pl.CostEstimate(
        flops=2 * N * K * HW * HW + 12 * N * K * HW,
        transcendentals=N * K * HW,
        bytes_accessed=4 * (N * K * HW + N * C * HW + HW * HW + 1),
    )

    out = pl.pallas_call(
        kernel,
        out_shape=jax.ShapeDtypeStruct((1,), jnp.float32),
        in_specs=[
            pl.BlockSpec(memory_space=pltpu.MemorySpace.VMEM),   # labels (N*K, HW)
            pl.BlockSpec(memory_space=pltpu.MemorySpace.VMEM),   # inputs (N*C, HW)
            pl.BlockSpec(memory_space=pltpu.MemorySpace.VMEM),   # kron(A_H, A_W)
        ],
        out_specs=pl.BlockSpec(memory_space=pltpu.MemorySpace.SMEM),
        cost_estimate=cost,
        # No grid: a single kernel invocation covers all classes/batches
        # (total input ~270 KiB << VMEM); per-core work is far below the
        # ~0.35 us grid-step overhead so one TensorCore is right at 16x16.
    )(labels2, inputs2, g_op)
    return out[0]


def _reference_ncut_loss(labels, inputs, radius=RADIUS, sigma_1=SIGMA_1, sigma_2=SIGMA_2):
    """Pure-JAX reference mirroring the PyTorch forward (explicit 2-D conv)."""
    labels = labels.astype(jnp.float32)
    inputs = inputs.astype(jnp.float32)
    N, K, H, W = labels.shape
    g = _gaussian_1d(radius, sigma_1)
    kern2d = jnp.asarray(np.outer(g, g).astype(np.float32))[None, None]  # (1,1,D,D)

    def conv(x):
        return lax.conv_general_dilated(
            x, kern2d, window_strides=(1, 1),
            padding=[(radius, radius), (radius, radius)],
            dimension_numbers=("NCHW", "OIHW", "NCHW"),
            precision=lax.Precision.HIGHEST)

    loss = 0.0
    for k in range(K):
        p = labels[:, k][:, None]                                   # (N,1,H,W)
        class_mean = (jnp.mean(inputs * p, axis=(2, 3), keepdims=True)
                      / (jnp.mean(p, axis=(2, 3), keepdims=True) + 1e-5))
        diff = jnp.sum((inputs - class_mean) ** 2, axis=1, keepdims=True)
        w = jnp.exp((diff ** 2) * (-1.0 / sigma_2 ** 2))
        num = jnp.sum(p * conv(p * w))
        den = jnp.sum(p * conv(w))
        loss = loss + jnp.abs(num / (den + 1e-6))
    return K - loss


if __name__ == "__main__":
    key = jax.random.PRNGKey(0)
    k1, k2 = jax.random.split(key)
    N, K, C, H, W = 2, 4, 3, 16, 16

    logits = jax.random.normal(k1, (N, K, H, W), dtype=jnp.float32)
    labels = jax.nn.softmax(logits, axis=1)                 # predicted class probs
    inputs = jax.random.uniform(k2, (N, C, H, W), dtype=jnp.float32)  # raw images

    loss = jax.block_until_ready(ncut_loss_2d(labels, inputs))
    ref = jax.block_until_ready(_reference_ncut_loss(labels, inputs))
    assert jnp.allclose(loss, ref, rtol=1e-3, atol=1e-3), (float(loss), float(ref))

    print("KERNEL_OK")
</pallas_src>

<mosaic_0001>
module attributes {stable_mosaic.version = 11 : i64} {
  func.func @kernel(%arg0: memref<8x256xf32, #tpu.memory_space<vmem>>, %arg1: memref<6x256xf32, #tpu.memory_space<vmem>>, %arg2: memref<256x256xf32, #tpu.memory_space<vmem>>, %arg3: memref<1xf32, #tpu.memory_space<smem>>) attributes {dimension_semantics = [], scalar_prefetch = 0 : i64, scratch_operands = 0 : i64, tpu.core_type = #tpu.core_type<tc>} {
    %c0 = arith.constant 0 : index
    %c0_0 = arith.constant 0 : index
    %0 = vector.load %arg0[%c0, %c0_0] : memref<8x256xf32, #tpu.memory_space<vmem>>, vector<8x256xf32>
    %c0_1 = arith.constant 0 : index
    %c0_2 = arith.constant 0 : index
    %1 = vector.load %arg1[%c0_1, %c0_2] : memref<6x256xf32, #tpu.memory_space<vmem>>, vector<6x256xf32>
    %c0_3 = arith.constant 0 : index
    %c0_4 = arith.constant 0 : index
    %2 = vector.load %arg2[%c0_3, %c0_4] : memref<256x256xf32, #tpu.memory_space<vmem>>, vector<256x256xf32>
    %cst = arith.constant dense<0.000000e+00> : vector<8x256xf32>
    %3 = tpu.matmul %0, %2, %cst {dimension_numbers = #tpu.dot_dimension_numbers<[1], [0], [0], [1], [0, 0, 1, 1], [], []>} : vector<8x256xf32>, vector<256x256xf32>, vector<8x256xf32> -> vector<8x256xf32>
    %cst_5 = arith.constant dense<0.000000e+00> : vector<8xf32>
    %4 = vector.multi_reduction <add>, %0, %cst_5 [1] : vector<8x256xf32> to vector<8xf32>
    %5 = vector.shape_cast %4 : vector<8xf32> to vector<8x1xf32>
    %cst_6 = arith.constant 2.560000e+02 : f32
    %6 = vector.broadcast %cst_6 : f32 to vector<8x1xf32>
    %7 = arith.divf %5, %6 : vector<8x1xf32>
    %cst_7 = arith.constant 9.99999974E-6 : f32
    %8 = vector.broadcast %cst_7 : f32 to vector<8x1xf32>
    %9 = arith.addf %7, %8 : vector<8x1xf32>
    %cst_8 = arith.constant 0.000000e+00 : f32
    %10 = vector.broadcast %cst_8 : f32 to vector<4x1xf32>
    %cst_9 = arith.constant 0.000000e+00 : f32
    %11 = vector.broadcast %cst_9 : f32 to vector<4x1xf32>
    %12 = vector.extract_strided_slice %0 {offsets = [0, 0], sizes = [4, 256], strides = [1, 1]} : vector<8x256xf32> to vector<4x256xf32>
    %13 = vector.extract_strided_slice %9 {offsets = [0, 0], sizes = [4, 1], strides = [1, 1]} : vector<8x1xf32> to vector<4x1xf32>
    %cst_10 = arith.constant 0.000000e+00 : f32
    %14 = vector.broadcast %cst_10 : f32 to vector<4x256xf32>
    %15 = vector.extract_strided_slice %1 {offsets = [0, 0], sizes = [1, 256], strides = [1, 1]} : vector<6x256xf32> to vector<1x256xf32>
    %16 = vector.broadcast %15 : vector<1x256xf32> to vector<4x256xf32>
    %17 = arith.mulf %16, %12 : vector<4x256xf32>
    %cst_11 = arith.constant dense<0.000000e+00> : vector<4xf32>
    %18 = vector.multi_reduction <add>, %17, %cst_11 [1] : vector<4x256xf32> to vector<4xf32>
    %19 = vector.shape_cast %18 : vector<4xf32> to vector<4x1xf32>
    %cst_12 = arith.constant 2.560000e+02 : f32
    %20 = vector.broadcast %cst_12 : f32 to vector<4x1xf32>
    %21 = arith.divf %19, %20 : vector<4x1xf32>
    %22 = arith.divf %21, %13 : vector<4x1xf32>
    %23 = vector.broadcast %15 : vector<1x256xf32> to vector<4x256xf32>
    %24 = vector.broadcast %22 : vector<4x1xf32> to vector<4x256xf32>
    %25 = arith.subf %23, %24 : vector<4x256xf32>
    %26 = arith.mulf %25, %25 : vector<4x256xf32>
    %27 = arith.addf %14, %26 : vector<4x256xf32>
    %28 = vector.extract_strided_slice %1 {offsets = [1, 0], sizes = [1, 256], strides = [1, 1]} : vector<6x256xf32> to vector<1x256xf32>
    %29 = vector.broadcast %28 : vector<1x256xf32> to vector<4x256xf32>
    %30 = arith.mulf %29, %12 : vector<4x256xf32>
    %cst_13 = arith.constant dense<0.000000e+00> : vector<4xf32>
    %31 = vector.multi_reduction <add>, %30, %cst_13 [1] : vector<4x256xf32> to vector<4xf32>
    %32 = vector.shape_cast %31 : vector<4xf32> to vector<4x1xf32>
    %cst_14 = arith.constant 2.560000e+02 : f32
    %33 = vector.broadcast %cst_14 : f32 to vector<4x1xf32>
    %34 = arith.divf %32, %33 : vector<4x1xf32>
    %35 = arith.divf %34, %13 : vector<4x1xf32>
    %36 = vector.broadcast %28 : vector<1x256xf32> to vector<4x256xf32>
    %37 = vector.broadcast %35 : vector<4x1xf32> to vector<4x256xf32>
    %38 = arith.subf %36, %37 : vector<4x256xf32>
    %39 = arith.mulf %38, %38 : vector<4x256xf32>
    %40 = arith.addf %27, %39 : vector<4x256xf32>
    %41 = vector.extract_strided_slice %1 {offsets = [2, 0], sizes = [1, 256], strides = [1, 1]} : vector<6x256xf32> to vector<1x256xf32>
    %42 = vector.broadcast %41 : vector<1x256xf32> to vector<4x256xf32>
    %43 = arith.mulf %42, %12 : vector<4x256xf32>
    %cst_15 = arith.constant dense<0.000000e+00> : vector<4xf32>
    %44 = vector.multi_reduction <add>, %43, %cst_15 [1] : vector<4x256xf32> to vector<4xf32>
    %45 = vector.shape_cast %44 : vector<4xf32> to vector<4x1xf32>
    %cst_16 = arith.constant 2.560000e+02 : f32
    %46 = vector.broadcast %cst_16 : f32 to vector<4x1xf32>
    %47 = arith.divf %45, %46 : vector<4x1xf32>
    %48 = arith.divf %47, %13 : vector<4x1xf32>
    %49 = vector.broadcast %41 : vector<1x256xf32> to vector<4x256xf32>
    %50 = vector.broadcast %48 : vector<4x1xf32> to vector<4x256xf32>
    %51 = arith.subf %49, %50 : vector<4x256xf32>
    %52 = arith.mulf %51, %51 : vector<4x256xf32>
    %53 = arith.addf %40, %52 : vector<4x256xf32>
    %54 = arith.mulf %53, %53 : vector<4x256xf32>
    %cst_17 = arith.constant -1.000000e+00 : f32
    %55 = vector.broadcast %cst_17 : f32 to vector<4x256xf32>
    %56 = arith.mulf %54, %55 : vector<4x256xf32>
    %57 = math.exp %56 : vector<4x256xf32>
    %58 = vector.extract_strided_slice %3 {offsets = [0, 0], sizes = [4, 256], strides = [1, 1]} : vector<8x256xf32> to vector<4x256xf32>
    %59 = arith.mulf %58, %57 : vector<4x256xf32>
    %60 = arith.mulf %59, %12 : vector<4x256xf32>
    %cst_18 = arith.constant dense<0.000000e+00> : vector<4xf32>
    %61 = vector.multi_reduction <add>, %60, %cst_18 [1] : vector<4x256xf32> to vector<4xf32>
    %62 = vector.shape_cast %61 : vector<4xf32> to vector<4x1xf32>
    %63 = arith.addf %10, %62 : vector<4x1xf32>
    %cst_19 = arith.constant dense<0.000000e+00> : vector<4xf32>
    %64 = vector.multi_reduction <add>, %59, %cst_19 [1] : vector<4x256xf32> to vector<4xf32>
    %65 = vector.shape_cast %64 : vector<4xf32> to vector<4x1xf32>
    %66 = arith.addf %11, %65 : vector<4x1xf32>
    %67 = vector.extract_strided_slice %0 {offsets = [4, 0], sizes = [4, 256], strides = [1, 1]} : vector<8x256xf32> to vector<4x256xf32>
    %68 = vector.extract_strided_slice %9 {offsets = [4, 0], sizes = [4, 1], strides = [1, 1]} : vector<8x1xf32> to vector<4x1xf32>
    %cst_20 = arith.constant 0.000000e+00 : f32
    %69 = vector.broadcast %cst_20 : f32 to vector<4x256xf32>
    %70 = vector.extract_strided_slice %1 {offsets = [3, 0], sizes = [1, 256], strides = [1, 1]} : vector<6x256xf32> to vector<1x256xf32>
    %71 = vector.broadcast %70 : vector<1x256xf32> to vector<4x256xf32>
    %72 = arith.mulf %71, %67 : vector<4x256xf32>
    %cst_21 = arith.constant dense<0.000000e+00> : vector<4xf32>
    %73 = vector.multi_reduction <add>, %72, %cst_21 [1] : vector<4x256xf32> to vector<4xf32>
    %74 = vector.shape_cast %73 : vector<4xf32> to vector<4x1xf32>
    %cst_22 = arith.constant 2.560000e+02 : f32
    %75 = vector.broadcast %cst_22 : f32 to vector<4x1xf32>
    %76 = arith.divf %74, %75 : vector<4x1xf32>
    %77 = arith.divf %76, %68 : vector<4x1xf32>
    %78 = vector.broadcast %70 : vector<1x256xf32> to vector<4x256xf32>
    %79 = vector.broadcast %77 : vector<4x1xf32> to vector<4x256xf32>
    %80 = arith.subf %78, %79 : vector<4x256xf32>
    %81 = arith.mulf %80, %80 : vector<4x256xf32>
    %82 = arith.addf %69, %81 : vector<4x256xf32>
    %83 = vector.extract_strided_slice %1 {offsets = [4, 0], sizes = [1, 256], strides = [1, 1]} : vector<6x256xf32> to vector<1x256xf32>
    %84 = vector.broadcast %83 : vector<1x256xf32> to vector<4x256xf32>
    %85 = arith.mulf %84, %67 : vector<4x256xf32>
    %cst_23 = arith.constant dense<0.000000e+00> : vector<4xf32>
    %86 = vector.multi_reduction <add>, %85, %cst_23 [1] : vector<4x256xf32> to vector<4xf32>
    %87 = vector.shape_cast %86 : vector<4xf32> to vector<4x1xf32>
    %cst_24 = arith.constant 2.560000e+02 : f32
    %88 = vector.broadcast %cst_24 : f32 to vector<4x1xf32>
    %89 = arith.divf %87, %88 : vector<4x1xf32>
    %90 = arith.divf %89, %68 : vector<4x1xf32>
    %91 = vector.broadcast %83 : vector<1x256xf32> to vector<4x256xf32>
    %92 = vector.broadcast %90 : vector<4x1xf32> to vector<4x256xf32>
    %93 = arith.subf %91, %92 : vector<4x256xf32>
    %94 = arith.mulf %93, %93 : vector<4x256xf32>
    %95 = arith.addf %82, %94 : vector<4x256xf32>
    %96 = vector.extract_strided_slice %1 {offsets = [5, 0], sizes = [1, 256], strides = [1, 1]} : vector<6x256xf32> to vector<1x256xf32>
    %97 = vector.broadcast %96 : vector<1x256xf32> to vector<4x256xf32>
    %98 = arith.mulf %97, %67 : vector<4x256xf32>
    %cst_25 = arith.constant dense<0.000000e+00> : vector<4xf32>
    %99 = vector.multi_reduction <add>, %98, %cst_25 [1] : vector<4x256xf32> to vector<4xf32>
    %100 = vector.shape_cast %99 : vector<4xf32> to vector<4x1xf32>
    %cst_26 = arith.constant 2.560000e+02 : f32
    %101 = vector.broadcast %cst_26 : f32 to vector<4x1xf32>
    %102 = arith.divf %100, %101 : vector<4x1xf32>
    %103 = arith.divf %102, %68 : vector<4x1xf32>
    %104 = vector.broadcast %96 : vector<1x256xf32> to vector<4x256xf32>
    %105 = vector.broadcast %103 : vector<4x1xf32> to vector<4x256xf32>
    %106 = arith.subf %104, %105 : vector<4x256xf32>
    %107 = arith.mulf %106, %106 : vector<4x256xf32>
    %108 = arith.addf %95, %107 : vector<4x256xf32>
    %109 = arith.mulf %108, %108 : vector<4x256xf32>
    %cst_27 = arith.constant -1.000000e+00 : f32
    %110 = vector.broadcast %cst_27 : f32 to vector<4x256xf32>
    %111 = arith.mulf %109, %110 : vector<4x256xf32>
    %112 = math.exp %111 : vector<4x256xf32>
    %113 = vector.extract_strided_slice %3 {offsets = [4, 0], sizes = [4, 256], strides = [1, 1]} : vector<8x256xf32> to vector<4x256xf32>
    %114 = arith.mulf %113, %112 : vector<4x256xf32>
    %115 = arith.mulf %114, %67 : vector<4x256xf32>
    %cst_28 = arith.constant dense<0.000000e+00> : vector<4xf32>
    %116 = vector.multi_reduction <add>, %115, %cst_28 [1] : vector<4x256xf32> to vector<4xf32>
    %117 = vector.shape_cast %116 : vector<4xf32> to vector<4x1xf32>
    %118 = arith.addf %63, %117 : vector<4x1xf32>
    %cst_29 = arith.constant dense<0.000000e+00> : vector<4xf32>
    %119 = vector.multi_reduction <add>, %114, %cst_29 [1] : vector<4x256xf32> to vector<4xf32>
    %120 = vector.shape_cast %119 : vector<4xf32> to vector<4x1xf32>
    %121 = arith.addf %66, %120 : vector<4x1xf32>
    %cst_30 = arith.constant 9.99999997E-7 : f32
    %122 = vector.broadcast %cst_30 : f32 to vector<4x1xf32>
    %123 = arith.addf %121, %122 : vector<4x1xf32>
    %124 = arith.divf %118, %123 : vector<4x1xf32>
    %125 = math.absf %124 : vector<4x1xf32>
    %126 = vector.shape_cast %125 : vector<4x1xf32> to vector<1x4x1xf32>
    %cst_31 = arith.constant dense<0.000000e+00> : vector<1xf32>
    %127 = vector.multi_reduction <add>, %126, %cst_31 [1, 2] : vector<1x4x1xf32> to vector<1xf32>
    %128 = vector.shape_cast %127 : vector<1xf32> to vector<1x1x1xf32>
    %129 = vector.extract %128[0, 0, 0] : f32 from vector<1x1x1xf32>
    %cst_32 = arith.constant 4.000000e+00 : f32
    %130 = arith.subf %cst_32, %129 : f32
    %c0_33 = arith.constant 0 : index
    %131 = memref.load %arg3[%c0_33] : memref<1xf32, #tpu.memory_space<smem>>
    memref.store %130, %arg3[%c0_33] : memref<1xf32, #tpu.memory_space<smem>>
    return
  }
}

</mosaic_0001>

<llo_original>
// kernel: tpu_custom_call.1
$region0: #{tpu_custom_call.1}
  #allocation0 [shape = 'u32[]', space=smem, size = 0x4, offset = 0x4, fixed_abs, tag = 'smem constant byte address 0x4 - core index']
  #allocation1 [shape = 'u32[144,128]{1,0:T(1,128)}', space=vmem, size = 0x12000, scoped, tag = 'internal scratch']
  %s0 = inlined_call_operand.hbm [shape: f32[8,256], index: 0, kind: input, shape index: {}]
  %s1 = inlined_call_operand.hbm [shape: f32[6,256], index: 1, kind: input, shape index: {}]
  %s2 = inlined_call_operand.hbm [shape: f32[256,256], index: 2, kind: input, shape index: {}]
  %s3 = inlined_call_operand.hbm [shape: f32[1], index: 3, kind: output, shape index: {}]
  %s4 = sld [smem:[#allocation0]]
  $region34: #{tpu_custom_call.1} parent=0
    _
  %s6 = ssub.s32 1, %s4
  %s7 = scalar_select 0, %s6, %s4
  $region1: #{tpu_custom_call.1} parent=0
    #allocation2 [shape = 'u8[8192]{0}', space=vmem, size = 0x2000, scoped, tag = 'input window, operand 0, single buffered']
    #allocation3 [shape = 's32[1]{0}', space=sflag, size = 0x4, scoped, tag = 'scoped memory for tpu_custom_call.1']
    #allocation4 [shape = 's32[1]{0}', space=sflag, size = 0x4, scoped, tag = 'scoped memory for tpu_custom_call.1']
    #allocation5 [shape = 'u8[8192]{0}', space=vmem, size = 0x2000, scoped, tag = 'input window, operand 1, single buffered']
    #allocation6 [shape = 's32[1]{0}', space=sflag, size = 0x4, scoped, tag = 'scoped memory for tpu_custom_call.1']
    #allocation7 [shape = 'u8[262144]{0}', space=vmem, size = 0x40000, scoped, tag = 'input window, operand 2, single buffered']
    #allocation8 [shape = 'u8[512]{0}', space=smem, size = 0x200, scoped, tag = 'output window, operand 0, single buffered']
    %8 = vsyncpa [#allocation3], 0
    %9 = vsyncpa [#allocation6], 0
    %10 = vsyncpa [#allocation4], 0
    // Predicated region
    $region2: #{tpu_custom_call.1} parent=1 // pred_check
      _
    $region3: #{tpu_custom_call.1} parent=1 // pred_check_branch
      %12 = sbr.rel (0) target = $region5
    $region4: #{tpu_custom_call.1} parent=1 // pred_region
      %s14 = ssub.s32 256, 256
      %15 = vsyncadd [#allocation3], %s14
      %s17 = sshll.u32 [#allocation2], 4
      %s18 = int_to_ptr.vmem [resolvable:$true] %s17
      %20 = dma.hbm_to_vmem [thread:$0]  %s0, 256, %s18, [#allocation3]
    $region5: #{tpu_custom_call.1} parent=1 // pred_fallthru
      _
    // Predicated region
    $region6: #{tpu_custom_call.1} parent=1 // pred_check
      _
    $region7: #{tpu_custom_call.1} parent=1 // pred_check_branch
      %22 = sbr.rel (0) target = $region9
    $region8: #{tpu_custom_call.1} parent=1 // pred_region
      %s24 = ssub.s32 256, 256
      %25 = vsyncadd [#allocation6], %s24
      %s27 = sshll.u32 [#allocation5], 4
      %s28 = int_to_ptr.vmem [resolvable:$true] %s27
      %30 = dma.hbm_to_vmem [thread:$0]  %s1, 256, %s28, [#allocation6]
    $region9: #{tpu_custom_call.1} parent=1 // pred_fallthru
      _
    // Predicated region
    $region10: #{tpu_custom_call.1} parent=1 // pred_check
      _
    $region11: #{tpu_custom_call.1} parent=1 // pred_check_branch
      %32 = sbr.rel (0) target = $region13
    $region12: #{tpu_custom_call.1} parent=1 // pred_region
      %s34 = ssub.s32 8192, 8192
      %35 = vsyncadd [#allocation6], %s34
      %s36 = sshll.u32 [#allocation7], 4
      %s37 = int_to_ptr.vmem [resolvable:$true] %s36
      %42 = dma.hbm_to_vmem [thread:$0]  %s2, 8192, %s37, [#allocation6], 256, 256, 16
    $region13: #{tpu_custom_call.1} parent=1 // pred_fallthru
      _
    // Predicated region
    $region14: #{tpu_custom_call.1} parent=1 // pred_check
      _
    $region15: #{tpu_custom_call.1} parent=1 // pred_check_branch
      %44 = sbr.rel (0) target = $region17
    $region16: #{tpu_custom_call.1} parent=1 // pred_region
      %45 = dma.done [#allocation3], 256
    $region17: #{tpu_custom_call.1} parent=1 // pred_fallthru
      _
    // Predicated region
    $region18: #{tpu_custom_call.1} parent=1 // pred_check
      _
    $region19: #{tpu_custom_call.1} parent=1 // pred_check_branch
      %47 = sbr.rel (0) target = $region21
    $region20: #{tpu_custom_call.1} parent=1 // pred_region
      %48 = dma.done [#allocation6], 256
    $region21: #{tpu_custom_call.1} parent=1 // pred_fallthru
      _
    // Predicated region
    $region22: #{tpu_custom_call.1} parent=1 // pred_check
      _
    $region23: #{tpu_custom_call.1} parent=1 // pred_check_branch
      %50 = sbr.rel (0) target = $region25
    $region24: #{tpu_custom_call.1} parent=1 // pred_region
      %51 = dma.done [#allocation6], 8192
    $region25: #{tpu_custom_call.1} parent=1 // pred_fallthru
      _
    %v52 = vld [vmem:[#allocation2] sm:$0xff]
    %v53 = vld [vmem:[#allocation2 + $0x8] sm:$0xff]
    %v54 = vld [vmem:[#allocation5] sm:$0x3f]
    %v55 = vld [vmem:[#allocation5 + $0x8] sm:$0x3f]
    %v56 = vld [vmem:[#allocation7] sm:$0xff]
    %v57 = vld [vmem:[#allocation7 + $0x8] sm:$0xff]
    %v58 = vld [vmem:[#allocation7 + $0x10] sm:$0xff]
    %v59 = vld [vmem:[#allocation7 + $0x18] sm:$0xff]
    %v60 = vld [vmem:[#allocation7 + $0x20] sm:$0xff]
    %v61 = vld [vmem:[#allocation7 + $0x28] sm:$0xff]
    %v62 = vld [vmem:[#allocation7 + $0x30] sm:$0xff]
    %v63 = vld [vmem:[#allocation7 + $0x38] sm:$0xff]
    %v64 = vld [vmem:[#allocation7 + $0x40] sm:$0xff]
    %v65 = vld [vmem:[#allocation7 + $0x48] sm:$0xff]
    %v66 = vld [vmem:[#allocation7 + $0x50] sm:$0xff]
    %v67 = vld [vmem:[#allocation7 + $0x58] sm:$0xff]
    %v68 = vld [vmem:[#allocation7 + $0x60] sm:$0xff]
    %v69 = vld [vmem:[#allocation7 + $0x68] sm:$0xff]
    %v70 = vld [vmem:[#allocation7 + $0x70] sm:$0xff]
    %v71 = vld [vmem:[#allocation7 + $0x78] sm:$0xff]
    %v72 = vld [vmem:[#allocation7 + $0x80] sm:$0xff]
    %v73 = vld [vmem:[#allocation7 + $0x88] sm:$0xff]
    %v74 = vld [vmem:[#allocation7 + $0x90] sm:$0xff]
    %v75 = vld [vmem:[#allocation7 + $0x98] sm:$0xff]
    %v76 = vld [vmem:[#allocation7 + $0xa0] sm:$0xff]
    %v77 = vld [vmem:[#allocation7 + $0xa8] sm:$0xff]
    %v78 = vld [vmem:[#allocation7 + $0xb0] sm:$0xff]
    %v79 = vld [vmem:[#allocation7 + $0xb8] sm:$0xff]
    %v80 = vld [vmem:[#allocation7 + $0xc0] sm:$0xff]
    %v81 = vld [vmem:[#allocation7 + $0xc8] sm:$0xff]
    %v82 = vld [vmem:[#allocation7 + $0xd0] sm:$0xff]
    %v83 = vld [vmem:[#allocation7 + $0xd8] sm:$0xff]
    %v84 = vld [vmem:[#allocation7 + $0xe0] sm:$0xff]
    %v85 = vld [vmem:[#allocation7 + $0xe8] sm:$0xff]
    %v86 = vld [vmem:[#allocation7 + $0xf0] sm:$0xff]
    %v87 = vld [vmem:[#allocation7 + $0xf8] sm:$0xff]
    %v88 = vld [vmem:[#allocation7 + $0x100] sm:$0xff]
    %v89 = vld [vmem:[#allocation7 + $0x108] sm:$0xff]
    %v90 = vld [vmem:[#allocation7 + $0x110] sm:$0xff]
    %v91 = vld [vmem:[#allocation7 + $0x118] sm:$0xff]
    %v92 = vld [vmem:[#allocation7 + $0x120] sm:$0xff]
    %v93 = vld [vmem:[#allocation7 + $0x128] sm:$0xff]
    %v94 = vld [vmem:[#allocation7 + $0x130] sm:$0xff]
    %v95 = vld [vmem:[#allocation7 + $0x138] sm:$0xff]
    %v96 = vld [vmem:[#allocation7 + $0x140] sm:$0xff]
    %v97 = vld [vmem:[#allocation7 + $0x148] sm:$0xff]
    %v98 = vld [vmem:[#allocation7 + $0x150] sm:$0xff]
    %v99 = vld [vmem:[#allocation7 + $0x158] sm:$0xff]
    %v100 = vld [vmem:[#allocation7 + $0x160] sm:$0xff]
    %v101 = vld [vmem:[#allocation7 + $0x168] sm:$0xff]
    %v102 = vld [vmem:[#allocation7 + $0x170] sm:$0xff]
    %v103 = vld [vmem:[#allocation7 + $0x178] sm:$0xff]
    %v104 = vld [vmem:[#allocation7 + $0x180] sm:$0xff]
    %v105 = vld [vmem:[#allocation7 + $0x188] sm:$0xff]
    %v106 = vld [vmem:[#allocation7 + $0x190] sm:$0xff]
    %v107 = vld [vmem:[#allocation7 + $0x198] sm:$0xff]
    %v108 = vld [vmem:[#allocation7 + $0x1a0] sm:$0xff]
    %v109 = vld [vmem:[#allocation7 + $0x1a8] sm:$0xff]
    %v110 = vld [vmem:[#allocation7 + $0x1b0] sm:$0xff]
    %v111 = vld [vmem:[#allocation7 + $0x1b8] sm:$0xff]
    %v112 = vld [vmem:[#allocation7 + $0x1c0] sm:$0xff]
    %v113 = vld [vmem:[#allocation7 + $0x1c8] sm:$0xff]
    %v114 = vld [vmem:[#allocation7 + $0x1d0] sm:$0xff]
    %v115 = vld [vmem:[#allocation7 + $0x1d8] sm:$0xff]
    %v116 = vld [vmem:[#allocation7 + $0x1e0] sm:$0xff]
    %v117 = vld [vmem:[#allocation7 + $0x1e8] sm:$0xff]
    %v118 = vld [vmem:[#allocation7 + $0x1f0] sm:$0xff]
    %v119 = vld [vmem:[#allocation7 + $0x1f8] sm:$0xff]
    %120 = vmatprep.subr.mxu0 %v57
    %121 = vmatpush1.msra.mxu0 %v56
    %122 = vmatprep.subr.mxu0 %v59
    %123 = vmatpush1.msra.mxu0 %v58
    %124 = vmatprep.subr.mxu0 %v61
    %125 = vmatpush1.msra.mxu0 %v60
    %126 = vmatprep.subr.mxu0 %v63
    %127 = vmatpush1.msra.mxu0 %v62
    %128 = vmatprep.subr.mxu0 %v65
    %129 = vmatpush1.msra.mxu0 %v64
    %130 = vmatprep.subr.mxu0 %v67
    %131 = vmatpush1.msra.mxu0 %v66
    %132 = vmatprep.subr.mxu0 %v69
    %133 = vmatpush1.msra.mxu0 %v68
    %134 = vmatprep.subr.mxu0 %v71
    %135 = vmatpush1.msra.mxu0 %v70
    %136 = vmatprep.subr.mxu0 %v73
    %137 = vmatpush1.msra.mxu0 %v72
    %138 = vmatprep.subr.mxu0 %v75
    %139 = vmatpush1.msra.mxu0 %v74
    %140 = vmatprep.subr.mxu0 %v77
    %141 = vmatpush1.msra.mxu0 %v76
    %142 = vmatprep.subr.mxu0 %v79
    %143 = vmatpush1.msra.mxu0 %v78
    %144 = vmatprep.subr.mxu0 %v81
    %145 = vmatpush1.msra.mxu0 %v80
    %146 = vmatprep.subr.mxu0 %v83
    %147 = vmatpush1.msra.mxu0 %v82
    %148 = vmatprep.subr.mxu0 %v85
    %149 = vmatpush1.msra.mxu0 %v84
    %150 = vmatprep.subr.mxu0 %v87
    %151 = vmatpush1.msra.mxu0 %v86
    %152 = vmatprep.subr.mxu0 %v89
    %153 = vmatpush1.msra.mxu0 %v88
    %154 = vmatprep.subr.mxu0 %v91
    %155 = vmatpush1.msra.mxu0 %v90
    %156 = vmatprep.subr.mxu0 %v93
    %157 = vmatpush1.msra.mxu0 %v92
    %158 = vmatprep.subr.mxu0 %v95
    %159 = vmatpush1.msra.mxu0 %v94
    %160 = vmatprep.subr.mxu0 %v97
    %161 = vmatpush1.msra.mxu0 %v96
    %162 = vmatprep.subr.mxu0 %v99
    %163 = vmatpush1.msra.mxu0 %v98
    %164 = vmatprep.subr.mxu0 %v101
    %165 = vmatpush1.msra.mxu0 %v100
    %166 = vmatprep.subr.mxu0 %v103
    %167 = vmatpush1.msra.mxu0 %v102
    %168 = vmatprep.subr.mxu0 %v105
    %169 = vmatpush1.msra.mxu0 %v104
    %170 = vmatprep.subr.mxu0 %v107
    %171 = vmatpush1.msra.mxu0 %v106
    %172 = vmatprep.subr.mxu0 %v109
    %173 = vmatpush1.msra.mxu0 %v108
    %174 = vmatprep.subr.mxu0 %v111
    %175 = vmatpush1.msra.mxu0 %v110
    %176 = vmatprep.subr.mxu0 %v113
    %177 = vmatpush1.msra.mxu0 %v112
    %178 = vmatprep.subr.mxu0 %v115
    %179 = vmatpush1.msra.mxu0 %v114
    %180 = vmatprep.subr.mxu0 %v117
    %181 = vmatpush1.msra.mxu0 %v116
    %182 = vmatprep.subr.mxu0 %v119
    %183 = vmatpush1.msra.mxu0 %v118
    %184 = vmatprep.mubr.f32.mxu0 %v53
    %185 = vmatmul.mubr.f32.gmra.mrb[0].mxu0 %v52
    %v186 = vpop.f32.mrb[0].mxu0
    %v187 = vadd.f32 0.0, %v186
    %v188 = vpop.f32.mrb[0].mxu0
    %v189 = vadd.f32 0.0, %v188
    %190 = vdwg.mxu0
    %v191 = vadd.f32 %v52, %v53
    %192 = vadd.xlane.f32.xlu0 %v191
    %v193 = vpop.xlane.xlu0 %192
    %v194 = vrcp.pop 256.0
    %v195 = vmul.f32 %v193, %v194
    %v196 = vadd.f32 %v195, 1e-05
    %v197 = vlaneseq
    %v198 = vshrl.u32 %v197, 7
    %v199 = vsub.s32 0, %v198
    %v200 = vrot.slane %v54, %v199
    %v201 = vlaneseq
    %v202 = vshrl.u32 %v201, 7
    %v203 = vsub.s32 0, %v202
    %v204 = vrot.slane %v55, %v203
    %v205 = vmul.f32 %v200, %v52
    %v206 = vmul.f32 %v204, %v53
    %vm207 = vcmask 1043456
    %v208 = vsel %vm207, %v205, 0.0
    %v209 = vsel %vm207, %v206, 0.0
    %v210 = vadd.f32 %v208, %v209
    %211 = vadd.xlane.f32.xlu0 %v210
    %v212 = vpop.xlane.xlu0 %211
    %v213 = vmul.f32 %v212, %v194
    %v214 = vrcp.pop %v196
    %v215 = vmul.f32 %v213, %v214
    %v216 = vsub.f32 %v200, %v215
    %v217 = vsub.f32 %v204, %v215
    %v218 = vmul.f32 %v216, %v216
    %v219 = vmul.f32 %v217, %v217
    %v220 = vadd.f32 %v218, 0.0
    %v221 = vadd.f32 %v219, 0.0
    %v222 = vlaneseq
    %v223 = vshrl.u32 %v222, 7
    %v224 = vsub.s32 1, %v223
    %v225 = vrot.slane %v54, %v224
    %v226 = vlaneseq
    %v227 = vshrl.u32 %v226, 7
    %v228 = vsub.s32 1, %v227
    %v229 = vrot.slane %v55, %v228
    %v230 = vmul.f32 %v225, %v52
    %v231 = vmul.f32 %v229, %v53
    %v232 = vsel %vm207, %v230, 0.0
    %v233 = vsel %vm207, %v231, 0.0
    %v234 = vadd.f32 %v232, %v233
    %235 = vadd.xlane.f32.xlu0 %v234
    %v236 = vpop.xlane.xlu0 %235
    %v237 = vmul.f32 %v236, %v194
    %v238 = vmul.f32 %v237, %v214
    %v239 = vsub.f32 %v225, %v238
    %v240 = vsub.f32 %v229, %v238
    %v241 = vmul.f32 %v239, %v239
    %v242 = vmul.f32 %v240, %v240
    %v243 = vadd.f32 %v220, %v241
    %v244 = vadd.f32 %v221, %v242
    %v245 = vlaneseq
    %v246 = vshrl.u32 %v245, 7
    %v247 = vsub.s32 2, %v246
    %v248 = vrot.slane %v54, %v247
    %v249 = vlaneseq
    %v250 = vshrl.u32 %v249, 7
    %v251 = vsub.s32 2, %v250
    %v252 = vrot.slane %v55, %v251
    %v253 = vmul.f32 %v248, %v52
    %v254 = vmul.f32 %v252, %v53
    %v255 = vsel %vm207, %v253, 0.0
    %v256 = vsel %vm207, %v254, 0.0
    %v257 = vadd.f32 %v255, %v256
    %258 = vadd.xlane.f32.xlu0 %v257
    %v259 = vpop.xlane.xlu0 %258
    %v260 = vmul.f32 %v259, %v194
    %v261 = vmul.f32 %v260, %v214
    %v262 = vsub.f32 %v248, %v261
    %v263 = vsub.f32 %v252, %v261
    %v264 = vmul.f32 %v262, %v262
    %v265 = vmul.f32 %v263, %v263
    %v266 = vadd.f32 %v243, %v264
    %v267 = vadd.f32 %v244, %v265
    %v268 = vmul.f32 %v266, %v266
    %v269 = vmul.f32 %v267, %v267
    %v270 = vmul.f32 %v268, -1.0
    %v271 = vmul.f32 %v269, -1.0
    %v272 = vmul.f32 %v270, 1.442695
    %v273 = vpow.pop %v272
    %v274 = vmul.f32 %v271, 1.442695
    %v275 = vpow.pop %v274
    %v276 = vmul.f32 %v187, %v273
    %v277 = vmul.f32 %v189, %v275
    %v278 = vmul.f32 %v276, %v52
    %v279 = vmul.f32 %v277, %v53
    %v280 = vsel %vm207, %v278, 0.0
    %v281 = vsel %vm207, %v279, 0.0
    %v282 = vadd.f32 %v280, %v281
    %283 = vadd.xlane.f32.xlu0 %v282
    %v284 = vpop.xlane.xlu0 %283
    %v285 = vadd.f32 %v284, 0.0
    %v286 = vsel %vm207, %v276, 0.0
    %v287 = vsel %vm207, %v277, 0.0
    %v288 = vadd.f32 %v286, %v287
    %289 = vadd.xlane.f32.xlu0 %v288
    %v290 = vpop.xlane.xlu0 %289
    %v291 = vadd.f32 %v290, 0.0
    %v292 = vlaneseq
    %v293 = vshrl.u32 %v292, 7
    %v294 = vsub.s32 3, %v293
    %v295 = vrot.slane %v54, %v294
    %v296 = vlaneseq
    %v297 = vshrl.u32 %v296, 7
    %v298 = vsub.s32 3, %v297
    %v299 = vrot.slane %v55, %v298
    %v300 = vmul.f32 %v295, %v52
    %v301 = vmul.f32 %v299, %v53
    %vm302 = vcmask 1047556
    %v303 = vsel %vm302, %v300, 0.0
    %v304 = vsel %vm302, %v301, 0.0
    %v305 = vadd.f32 %v303, %v304
    %306 = vadd.xlane.f32.xlu0 %v305
    %v307 = vpop.xlane.xlu0 %306
    %v308 = vmul.f32 %v307, %v194
    %v309 = vmul.f32 %v308, %v214
    %v310 = vsub.f32 %v295, %v309
    %v311 = vsub.f32 %v299, %v309
    %v312 = vmul.f32 %v310, %v310
    %v313 = vmul.f32 %v311, %v311
    %v314 = vadd.f32 %v312, 0.0
    %v315 = vadd.f32 %v313, 0.0
    %v316 = vlaneseq
    %v317 = vshrl.u32 %v316, 7
    %v318 = vsub.s32 4, %v317
    %v319 = vrot.slane %v54, %v318
    %v320 = vlaneseq
    %v321 = vshrl.u32 %v320, 7
    %v322 = vsub.s32 4, %v321
    %v323 = vrot.slane %v55, %v322
    %v324 = vmul.f32 %v319, %v52
    %v325 = vmul.f32 %v323, %v53
    %v326 = vsel %vm302, %v324, 0.0
    %v327 = vsel %vm302, %v325, 0.0
    %v328 = vadd.f32 %v326, %v327
    %329 = vadd.xlane.f32.xlu0 %v328
    %v330 = vpop.xlane.xlu0 %329
    %v331 = vmul.f32 %v330, %v194
    %v332 = vmul.f32 %v331, %v214
    %v333 = vsub.f32 %v319, %v332
    %v334 = vsub.f32 %v323, %v332
    %v335 = vmul.f32 %v333, %v333
    %v336 = vmul.f32 %v334, %v334
    %v337 = vadd.f32 %v314, %v335
    %v338 = vadd.f32 %v315, %v336
    %v339 = vlaneseq
    %v340 = vshrl.u32 %v339, 7
    %v341 = vsub.s32 5, %v340
    %v342 = vrot.slane %v54, %v341
    %v343 = vlaneseq
    %v344 = vshrl.u32 %v343, 7
    %v345 = vsub.s32 5, %v344
    %v346 = vrot.slane %v55, %v345
    %v347 = vmul.f32 %v342, %v52
    %v348 = vmul.f32 %v346, %v53
    %v349 = vsel %vm302, %v347, 0.0
    %v350 = vsel %vm302, %v348, 0.0
    %v351 = vadd.f32 %v349, %v350
    %352 = vadd.xlane.f32.xlu0 %v351
    %v353 = vpop.xlane.xlu0 %352
    %v354 = vmul.f32 %v353, %v194
    %v355 = vmul.f32 %v354, %v214
    %v356 = vsub.f32 %v342, %v355
    %v357 = vsub.f32 %v346, %v355
    %v358 = vmul.f32 %v356, %v356
    %v359 = vmul.f32 %v357, %v357
    %v360 = vadd.f32 %v337, %v358
    %v361 = vadd.f32 %v338, %v359
    %v362 = vmul.f32 %v360, %v360
    %v363 = vmul.f32 %v361, %v361
    %v364 = vmul.f32 %v362, -1.0
    %v365 = vmul.f32 %v363, -1.0
    %v366 = vmul.f32 %v364, 1.442695
    %v367 = vpow.pop %v366
    %v368 = vmul.f32 %v365, 1.442695
    %v369 = vpow.pop %v368
    %v370 = vmul.f32 %v187, %v367
    %v371 = vmul.f32 %v189, %v369
    %v372 = vmul.f32 %v370, %v52
    %v373 = vmul.f32 %v371, %v53
    %v374 = vsel %vm302, %v372, 0.0
    %v375 = vsel %vm302, %v373, 0.0
    %v376 = vadd.f32 %v374, %v375
    %377 = vadd.xlane.f32.xlu0 %v376
    %v378 = vpop.xlane.xlu0 %377
    %v380 = vrot.slane %v378, 4
    %v382 = vadd.f32 %v285, %v380
    %v383 = vsel %vm302, %v370, 0.0
    %v384 = vsel %vm302, %v371, 0.0
    %v385 = vadd.f32 %v383, %v384
    %386 = vadd.xlane.f32.xlu0 %v385
    %v387 = vpop.xlane.xlu0 %386
    %v389 = vrot.slane %v387, 4
    %v391 = vadd.f32 %v291, %v389
    %v392 = vadd.f32 %v391, 1e-06
    %v393 = vrcp.pop %v392
    %v394 = vmul.f32 %v382, %v393
    %v395 = vand.u32 2147483647, %v394
    %vm396 = vcmask 3072
    %v397 = vsel %vm396, %v395, 0.0
    %398 = vadd.xlane.f32.xlu0 %v397
    %v399 = vpop.xlane.xlu0 %398
    %v400 = vrot.slane %v399, 4
    %v401 = vadd.f32 %v399, %v400
    %v402 = vrot.slane %v401, 2
    %v403 = vadd.f32 %v401, %v402
    %v404 = vrot.slane %v403, 1
    %v405 = vadd.f32 %v403, %v404
    %s406 = vtos %v405
    %s407 = ssub.f32 4.0, %s406
    %s408 = scalar_lea.smem [#allocation8], 0
    %409 = sst [smem:[%s408]] %s407
    // Predicated region
    $region26: #{tpu_custom_call.1} parent=1 // pred_check
      _
    $region27: #{tpu_custom_call.1} parent=1 // pred_check_branch
      %411 = sbr.rel (0) target = $region29
    $region28: #{tpu_custom_call.1} parent=1 // pred_region
      %s413 = ssub.s32 16, 16
      %414 = vsyncadd [#allocation4], %s413
      %417 = dma.smem_to_hbm [#allocation8], 16, %s3, [#allocation4]
    $region29: #{tpu_custom_call.1} parent=1 // pred_fallthru
      _
    // Predicated region
    $region30: #{tpu_custom_call.1} parent=1 // pred_check
      _
    $region31: #{tpu_custom_call.1} parent=1 // pred_check_branch
      %419 = sbr.rel (0) target = $region33
    $region32: #{tpu_custom_call.1} parent=1 // pred_region
      %420 = dma.done [#allocation4], 16
    $region33: #{tpu_custom_call.1} parent=1 // pred_fallthru
      _
    %421 = sfence
    %422 = vsyncpa [#allocation3], 1
    %423 = vsyncpa [#allocation6], 1
    %424 = vsyncpa [#allocation4], 1

</llo_original>
